<compile_context>
chip_gen: v7x
topology: tpu7x:2x2x1
jax: 0.10.0
libtpu: 0.0.40
codegen_flags: <defaults>
</compile_context>

<pallas_src>
import functools

import jax
import jax.numpy as jnp
from jax.experimental import pallas as pl
from jax.experimental.pallas import tpu as pltpu


def _round_up(v, m):
    return (v + m - 1) // m * m


def _encoder_kernel(h_pad, cout_pad,
                    x_ref, w0_ref, w1_ref, wm1_ref, wm2_ref, b_ref,
                    out_ref):
    """One (TILE_M, C) row tile of the fully fused Encoder forward.

    Weights are pre-transposed to [in, out] with BN(eval) + Linear bias folded
    in; every channel dim is zero-padded to a multiple of 128 so the matmuls
    are full MXU tiles and the output store is lane-dense.
    """
    cdt = x_ref.dtype                       # matmul input dtype (bf16 or f32)

    b0 = b_ref[0:1, :h_pad]
    b1 = b_ref[1:2, :h_pad]
    bm1 = b_ref[2:3, :h_pad]
    bm2 = b_ref[3:4, :cout_pad]

    # layer 0: skip Linear (+folded BN) + ReLU
    h = jnp.dot(x_ref[...], w0_ref[...], preferred_element_type=jnp.float32)
    h = jnp.maximum(h + b0, 0.0).astype(cdt)

    # layer 1: skip Linear (+folded BN) + ReLU
    h = jnp.dot(h, w1_ref[...], preferred_element_type=jnp.float32)
    h = jnp.maximum(h + b1, 0.0).astype(cdt)

    # MLP: Linear (+folded BN) -> ReLU -> Dropout(id, eval) -> Linear
    m = jnp.dot(h, wm1_ref[...], preferred_element_type=jnp.float32)
    m = jnp.maximum(m + bm1, 0.0).astype(cdt)

    y = jnp.dot(m, wm2_ref[...], preferred_element_type=jnp.float32) + bm2
    out_ref[...] = y.astype(out_ref.dtype)


def _fold_bn(gamma, beta, running_mean, running_var, eps=1e-5):
    """BatchNorm1d (eval mode) -> per-channel affine (scale, shift), 1-D."""
    scale = gamma / jnp.sqrt(running_var + eps)
    shift = beta - running_mean * scale
    return scale, shift


def encoder_forward(x, params, target_sizes, *, compute_dtype=jnp.bfloat16):
    """x: (N, in_channels) f32; target_sizes: (n1, n2) static python ints."""
    n1, n2 = target_sizes
    # The whole chain is row-wise (no conv contribution for default base_model),
    # so only the first min(n1, n2) rows ever reach the output.
    m_rows = min(n1, n2, x.shape[0])

    in_channels = x.shape[1]
    hidden = params["skip0_w"].shape[0]
    out_channels = params["mlp_w2"].shape[0]

    cin_p = _round_up(in_channels, 128)
    h_p = _round_up(hidden, 128)
    cout_p = _round_up(out_channels, 128)
    bias_w = max(h_p, cout_p)

    # Row tiling: TILE_M capped at 512 (safe for v7x's smaller VMEM), padded
    # to a sublane-aligned multiple of 8 for small problems.
    tile_m = 512 if m_rows >= 512 else max(8, _round_up(m_rows, 8))
    m_pad = _round_up(m_rows, tile_m)
    grid = (m_pad // tile_m,)

    # ---- fold BN(eval) + bias into pre-transposed [in, out] weights ----
    s0, t0 = _fold_bn(*params["bn0"])
    s1, t1 = _fold_bn(*params["bn1"])
    sm, tm = _fold_bn(*params["mlp_bn"])

    def pad2(a, r, c):
        return jnp.pad(a, ((0, r - a.shape[0]), (0, c - a.shape[1])))

    def pad1(v, w):
        return jnp.pad(v, (0, w - v.shape[0]))

    w0 = pad2(params["skip0_w"].T * s0[None, :], cin_p, h_p).astype(compute_dtype)
    w1 = pad2(params["skip1_w"].T * s1[None, :], h_p, h_p).astype(compute_dtype)
    wm1 = pad2(params["mlp_w1"].T * sm[None, :], h_p, h_p).astype(compute_dtype)
    wm2 = pad2(params["mlp_w2"].T, h_p, cout_p).astype(compute_dtype)

    bias = jnp.stack([
        pad1(params["skip0_b"] * s0 + t0, bias_w),
        pad1(params["skip1_b"] * s1 + t1, bias_w),
        pad1(params["mlp_b1"] * sm + tm, bias_w),
        pad1(params["mlp_b2"], bias_w),
    ]).astype(jnp.float32)                                    # (4, bias_w)

    xs = pad2(x[:m_rows].astype(jnp.float32), m_pad, cin_p).astype(compute_dtype)

    out = pl.pallas_call(
        functools.partial(_encoder_kernel, h_p, cout_p),
        out_shape=jax.ShapeDtypeStruct((m_pad, cout_p), jnp.float32),
        grid=grid,
        in_specs=[
            pl.BlockSpec((tile_m, cin_p), lambda i: (i, 0)),   # row-tiled x
            pl.BlockSpec((cin_p, h_p), lambda i: (0, 0)),      # VMEM-resident W
            pl.BlockSpec((h_p, h_p), lambda i: (0, 0)),
            pl.BlockSpec((h_p, h_p), lambda i: (0, 0)),
            pl.BlockSpec((h_p, cout_p), lambda i: (0, 0)),
            pl.BlockSpec((4, bias_w), lambda i: (0, 0)),       # packed biases
        ],
        out_specs=pl.BlockSpec((tile_m, cout_p), lambda i: (i, 0)),
        compiler_params=pltpu.CompilerParams(
            dimension_semantics=("parallel",)),
    )(xs, w0, w1, wm1, wm2, bias)

    return out[:m_rows, :out_channels]


def encoder_reference(x, params, target_sizes):
    """Pure-JAX reference matching the PyTorch forward (default base_model, eval)."""
    n1, n2 = target_sizes
    hp = jax.lax.Precision.HIGHEST

    def dot(a, b):
        return jnp.dot(a, b, precision=hp)

    s0, t0 = _fold_bn(*params["bn0"])
    s1, t1 = _fold_bn(*params["bn1"])
    sm, tm = _fold_bn(*params["mlp_bn"])

    h = dot(x[:n1], params["skip0_w"].T) + params["skip0_b"]
    h = jnp.maximum(h * s0 + t0, 0.0)
    h = dot(h[:n2], params["skip1_w"].T) + params["skip1_b"]
    h = jnp.maximum(h * s1 + t1, 0.0)
    m = dot(h, params["mlp_w1"].T) + params["mlp_b1"]
    m = jnp.maximum(m * sm + tm, 0.0)
    return dot(m, params["mlp_w2"].T) + params["mlp_b2"]


def init_params(key, in_channels, hidden_channels, out_channels):
    ks = jax.random.split(key, 12)

    def lin(kw, kb, fan_out, fan_in):
        scale = 1.0 / float(fan_in) ** 0.5
        w = jax.random.normal(kw, (fan_out, fan_in), jnp.float32) * scale
        b = jax.random.normal(kb, (fan_out,), jnp.float32) * scale
        return w, b

    def bn(k, c):
        k1, k2, k3, k4 = jax.random.split(k, 4)
        gamma = 1.0 + 0.1 * jax.random.normal(k1, (c,), jnp.float32)
        beta = 0.1 * jax.random.normal(k2, (c,), jnp.float32)
        rmean = 0.1 * jax.random.normal(k3, (c,), jnp.float32)
        rvar = 1.0 + 0.1 * jax.random.uniform(k4, (c,), jnp.float32)
        return gamma, beta, rmean, rvar

    skip0_w, skip0_b = lin(ks[0], ks[1], hidden_channels, in_channels)
    skip1_w, skip1_b = lin(ks[2], ks[3], hidden_channels, hidden_channels)
    mlp_w1, mlp_b1 = lin(ks[4], ks[5], hidden_channels, hidden_channels)
    mlp_w2, mlp_b2 = lin(ks[6], ks[7], out_channels, hidden_channels)

    return {
        "skip0_w": skip0_w, "skip0_b": skip0_b, "bn0": bn(ks[8], hidden_channels),
        "skip1_w": skip1_w, "skip1_b": skip1_b, "bn1": bn(ks[9], hidden_channels),
        "mlp_w1": mlp_w1, "mlp_b1": mlp_b1, "mlp_bn": bn(ks[10], hidden_channels),
        "mlp_w2": mlp_w2, "mlp_b2": mlp_b2,
    }


def _run_case(in_c, hid_c, out_c, n_src, n1, n2):
    key = jax.random.PRNGKey(0)
    k_x, k_p = jax.random.split(key)
    x = jax.random.normal(k_x, (n_src, in_c), jnp.float32)
    params = init_params(k_p, in_c, hid_c, out_c)

    ref = encoder_reference(x, params, (n1, n2))

    # f32 MXU path (structure / semantics check)
    out_f32 = jax.block_until_ready(
        encoder_forward(x, params, (n1, n2), compute_dtype=jnp.float32))
    assert out_f32.shape == ref.shape, (out_f32.shape, ref.shape)
    assert jnp.allclose(out_f32, ref, atol=2e-2, rtol=2e-2), "f32 mismatch"

    # bf16 MXU path (default, performance path)
    out_bf16 = jax.block_until_ready(
        encoder_forward(x, params, (n1, n2), compute_dtype=jnp.bfloat16))
    assert out_bf16.shape == ref.shape, (out_bf16.shape, ref.shape)
    assert jnp.allclose(out_bf16, ref, atol=6e-2, rtol=6e-2), "bf16 mismatch"


if __name__ == "__main__":
    # Small case (grid of one tile, heavy channel padding).
    _run_case(in_c=16, hid_c=32, out_c=8, n_src=32, n1=16, n2=8)
    # Larger case exercising the multi-tile row grid and non-128 channels.
    _run_case(in_c=100, hid_c=256, out_c=64, n_src=2048, n1=1024, n2=600)
    print("KERNEL_OK")
</pallas_src>

<mosaic_0001>
module attributes {stable_mosaic.version = 11 : i64} {
  func.func @_encoder_kernel(%arg0: i32, %arg1: memref<8x128xf32, #tpu.memory_space<vmem>>, %arg2: memref<128x128xf32, #tpu.memory_space<vmem>>, %arg3: memref<128x128xf32, #tpu.memory_space<vmem>>, %arg4: memref<128x128xf32, #tpu.memory_space<vmem>>, %arg5: memref<128x128xf32, #tpu.memory_space<vmem>>, %arg6: memref<4x128xf32, #tpu.memory_space<vmem>>, %arg7: memref<8x128xf32, #tpu.memory_space<vmem>>) attributes {dimension_semantics = [#tpu.dimension_semantics<parallel>], iteration_bounds = array<i64: 1>, scalar_prefetch = 0 : i64, scratch_operands = 0 : i64, tpu.core_type = #tpu.core_type<tc>, window_params = [{transform_indices = @transform_0, window_bounds = array<i64: 8, 128>}, {pipeline_mode = #tpu.pipeline_mode<synchronous>, transform_indices = @transform_1, window_bounds = array<i64: 128, 128>}, {pipeline_mode = #tpu.pipeline_mode<synchronous>, transform_indices = @transform_2, window_bounds = array<i64: 128, 128>}, {pipeline_mode = #tpu.pipeline_mode<synchronous>, transform_indices = @transform_3, window_bounds = array<i64: 128, 128>}, {pipeline_mode = #tpu.pipeline_mode<synchronous>, transform_indices = @transform_4, window_bounds = array<i64: 128, 128>}, {pipeline_mode = #tpu.pipeline_mode<synchronous>, transform_indices = @transform_5, window_bounds = array<i64: 4, 128>}, {transform_indices = @transform_6, window_bounds = array<i64: 8, 128>}]} {
    %c0 = arith.constant 0 : index
    %c0_0 = arith.constant 0 : index
    %0 = vector.load %arg6[%c0, %c0_0] : memref<4x128xf32, #tpu.memory_space<vmem>>, vector<1x128xf32>
    %c1 = arith.constant 1 : index
    %c0_1 = arith.constant 0 : index
    %1 = vector.load %arg6[%c1, %c0_1] : memref<4x128xf32, #tpu.memory_space<vmem>>, vector<1x128xf32>
    %c2 = arith.constant 2 : index
    %c0_2 = arith.constant 0 : index
    %2 = vector.load %arg6[%c2, %c0_2] : memref<4x128xf32, #tpu.memory_space<vmem>>, vector<1x128xf32>
    %c3 = arith.constant 3 : index
    %c0_3 = arith.constant 0 : index
    %3 = vector.load %arg6[%c3, %c0_3] : memref<4x128xf32, #tpu.memory_space<vmem>>, vector<1x128xf32>
    %c0_4 = arith.constant 0 : index
    %c0_5 = arith.constant 0 : index
    %4 = vector.load %arg1[%c0_4, %c0_5] : memref<8x128xf32, #tpu.memory_space<vmem>>, vector<8x128xf32>
    %c0_6 = arith.constant 0 : index
    %c0_7 = arith.constant 0 : index
    %5 = vector.load %arg2[%c0_6, %c0_7] : memref<128x128xf32, #tpu.memory_space<vmem>>, vector<128x128xf32>
    %cst = arith.constant dense<0.000000e+00> : vector<8x128xf32>
    %6 = tpu.matmul %4, %5, %cst {dimension_numbers = #tpu.dot_dimension_numbers<[1], [0], [0], [1], [0, 0, 1, 1], [], []>} : vector<8x128xf32>, vector<128x128xf32>, vector<8x128xf32> -> vector<8x128xf32>
    %7 = vector.broadcast %0 : vector<1x128xf32> to vector<8x128xf32>
    %8 = arith.addf %6, %7 : vector<8x128xf32>
    %cst_8 = arith.constant 0.000000e+00 : f32
    %9 = vector.broadcast %cst_8 : f32 to vector<8x128xf32>
    %10 = arith.maximumf %8, %9 : vector<8x128xf32>
    %c0_9 = arith.constant 0 : index
    %c0_10 = arith.constant 0 : index
    %11 = vector.load %arg3[%c0_9, %c0_10] : memref<128x128xf32, #tpu.memory_space<vmem>>, vector<128x128xf32>
    %cst_11 = arith.constant dense<0.000000e+00> : vector<8x128xf32>
    %12 = tpu.matmul %10, %11, %cst_11 {dimension_numbers = #tpu.dot_dimension_numbers<[1], [0], [0], [1], [0, 0, 1, 1], [], []>} : vector<8x128xf32>, vector<128x128xf32>, vector<8x128xf32> -> vector<8x128xf32>
    %13 = vector.broadcast %1 : vector<1x128xf32> to vector<8x128xf32>
    %14 = arith.addf %12, %13 : vector<8x128xf32>
    %cst_12 = arith.constant 0.000000e+00 : f32
    %15 = vector.broadcast %cst_12 : f32 to vector<8x128xf32>
    %16 = arith.maximumf %14, %15 : vector<8x128xf32>
    %c0_13 = arith.constant 0 : index
    %c0_14 = arith.constant 0 : index
    %17 = vector.load %arg4[%c0_13, %c0_14] : memref<128x128xf32, #tpu.memory_space<vmem>>, vector<128x128xf32>
    %cst_15 = arith.constant dense<0.000000e+00> : vector<8x128xf32>
    %18 = tpu.matmul %16, %17, %cst_15 {dimension_numbers = #tpu.dot_dimension_numbers<[1], [0], [0], [1], [0, 0, 1, 1], [], []>} : vector<8x128xf32>, vector<128x128xf32>, vector<8x128xf32> -> vector<8x128xf32>
    %19 = vector.broadcast %2 : vector<1x128xf32> to vector<8x128xf32>
    %20 = arith.addf %18, %19 : vector<8x128xf32>
    %cst_16 = arith.constant 0.000000e+00 : f32
    %21 = vector.broadcast %cst_16 : f32 to vector<8x128xf32>
    %22 = arith.maximumf %20, %21 : vector<8x128xf32>
    %c0_17 = arith.constant 0 : index
    %c0_18 = arith.constant 0 : index
    %23 = vector.load %arg5[%c0_17, %c0_18] : memref<128x128xf32, #tpu.memory_space<vmem>>, vector<128x128xf32>
    %cst_19 = arith.constant dense<0.000000e+00> : vector<8x128xf32>
    %24 = tpu.matmul %22, %23, %cst_19 {dimension_numbers = #tpu.dot_dimension_numbers<[1], [0], [0], [1], [0, 0, 1, 1], [], []>} : vector<8x128xf32>, vector<128x128xf32>, vector<8x128xf32> -> vector<8x128xf32>
    %25 = vector.broadcast %3 : vector<1x128xf32> to vector<8x128xf32>
    %26 = arith.addf %24, %25 : vector<8x128xf32>
    %c0_20 = arith.constant 0 : index
    %c0_21 = arith.constant 0 : index
    %27 = vector.load %arg7[%c0_20, %c0_21] : memref<8x128xf32, #tpu.memory_space<vmem>>, vector<8x128xf32>
    tpu.vector_store %arg7[%c0_20, %c0_21], %26 {strides = array<i32>} : memref<8x128xf32, #tpu.memory_space<vmem>>, vector<8x128xf32>,
    return
  }
  func.func @transform_0(%arg0: i32) -> (i32, i32) {
    %c0_i32 = arith.constant 0 : i32
    %c0_i32_0 = arith.constant 0 : i32
    return %arg0, %c0_i32 : i32, i32
  }
  func.func @transform_1(%arg0: i32) -> (i32, i32) {
    %c0_i32 = arith.constant 0 : i32
    %c0_i32_0 = arith.constant 0 : i32
    %c0_i32_1 = arith.constant 0 : i32
    return %c0_i32, %c0_i32_0 : i32, i32
  }
  func.func @transform_2(%arg0: i32) -> (i32, i32) {
    %c0_i32 = arith.constant 0 : i32
    %c0_i32_0 = arith.constant 0 : i32
    %c0_i32_1 = arith.constant 0 : i32
    return %c0_i32, %c0_i32_0 : i32, i32
  }
  func.func @transform_3(%arg0: i32) -> (i32, i32) {
    %c0_i32 = arith.constant 0 : i32
    %c0_i32_0 = arith.constant 0 : i32
    %c0_i32_1 = arith.constant 0 : i32
    return %c0_i32, %c0_i32_0 : i32, i32
  }
  func.func @transform_4(%arg0: i32) -> (i32, i32) {
    %c0_i32 = arith.constant 0 : i32
    %c0_i32_0 = arith.constant 0 : i32
    %c0_i32_1 = arith.constant 0 : i32
    return %c0_i32, %c0_i32_0 : i32, i32
  }
  func.func @transform_5(%arg0: i32) -> (i32, i32) {
    %c0_i32 = arith.constant 0 : i32
    %c0_i32_0 = arith.constant 0 : i32
    %c0_i32_1 = arith.constant 0 : i32
    return %c0_i32, %c0_i32_0 : i32, i32
  }
  func.func @transform_6(%arg0: i32) -> (i32, i32) {
    %c0_i32 = arith.constant 0 : i32
    %c0_i32_0 = arith.constant 0 : i32
    return %arg0, %c0_i32 : i32, i32
  }
}

</mosaic_0001>

<llo_original>
// kernel: tpu_custom_call.1
$region0: #{tpu_custom_call.1}
  #allocation0 [shape = 'u32[]', space=smem, size = 0x4, offset = 0x4, fixed_abs, tag = 'smem constant byte address 0x4 - core index']
  #allocation1 [shape = 'u32[144,128]{1,0:T(1,128)}', space=vmem, size = 0x12000, scoped, tag = 'internal scratch']
  %s0 = inlined_call_operand.hbm [shape: f32[8,128], index: 0, kind: input, shape index: {}]
  %s1 = inlined_call_operand.hbm [shape: f32[128,128], index: 1, kind: input, shape index: {}]
  %s2 = inlined_call_operand.hbm [shape: f32[128,128], index: 2, kind: input, shape index: {}]
  %s3 = inlined_call_operand.hbm [shape: f32[128,128], index: 3, kind: input, shape index: {}]
  %s4 = inlined_call_operand.hbm [shape: f32[128,128], index: 4, kind: input, shape index: {}]
  %s5 = inlined_call_operand.vmem [shape: f32[4,128], index: 5, kind: input, shape index: {}]
  %s6 = inlined_call_operand.hbm [shape: f32[8,128], index: 6, kind: output, shape index: {}]
  %s7 = sld [smem:[#allocation0]]
  $region54: #{tpu_custom_call.1} parent=0
    _
  %s9 = ssub.s32 1, %s7
  %s10 = scalar_select 0, %s9, %s7
  $region1: #{tpu_custom_call.1} parent=0
    #allocation2 [shape = 'u8[4096]{0}', space=vmem, size = 0x1000, scoped, tag = 'input window, operand 0, single buffered']
    #allocation3 [shape = 's32[1]{0}', space=sflag, size = 0x4, scoped, tag = 'scoped memory for tpu_custom_call.1']
    #allocation4 [shape = 's32[1]{0}', space=sflag, size = 0x4, scoped, tag = 'scoped memory for tpu_custom_call.1']
    #allocation5 [shape = 'u8[65536]{0}', space=vmem, size = 0x10000, scoped, tag = 'input window, operand 1, single buffered']
    #allocation6 [shape = 's32[1]{0}', space=sflag, size = 0x4, scoped, tag = 'scoped memory for tpu_custom_call.1']
    #allocation7 [shape = 'u8[65536]{0}', space=vmem, size = 0x10000, scoped, tag = 'input window, operand 2, single buffered']
    #allocation8 [shape = 'u8[65536]{0}', space=vmem, size = 0x10000, scoped, tag = 'input window, operand 3, single buffered']
    #allocation9 [shape = 's32[1]{0}', space=sflag, size = 0x4, scoped, tag = 'scoped memory for tpu_custom_call.1']
    #allocation10 [shape = 'u8[65536]{0}', space=vmem, size = 0x10000, scoped, tag = 'input window, operand 4, single buffered']
    #allocation11 [shape = 'u8[4096]{0}', space=vmem, size = 0x1000, scoped, tag = 'output window, operand 0, single buffered']
    %11 = vsyncpa [#allocation3], 0
    %12 = vsyncpa [#allocation6], 0
    %13 = vsyncpa [#allocation9], 0
    %14 = vsyncpa [#allocation4], 0
    // Predicated region
    $region2: #{tpu_custom_call.1} parent=1 // pred_check
      _
    $region3: #{tpu_custom_call.1} parent=1 // pred_check_branch
      %16 = sbr.rel (0) target = $region5
    $region4: #{tpu_custom_call.1} parent=1 // pred_region
      %s18 = ssub.s32 128, 128
      %19 = vsyncadd [#allocation3], %s18
      %s21 = sshll.u32 [#allocation2], 4
      %s22 = int_to_ptr.vmem [resolvable:$true] %s21
      %24 = dma.hbm_to_vmem [thread:$0]  %s0, 128, %s22, [#allocation3]
    $region5: #{tpu_custom_call.1} parent=1 // pred_fallthru
      _
    // Predicated region
    $region6: #{tpu_custom_call.1} parent=1 // pred_check
      _
    $region7: #{tpu_custom_call.1} parent=1 // pred_check_branch
      %26 = sbr.rel (0) target = $region9
    $region8: #{tpu_custom_call.1} parent=1 // pred_region
      %s28 = ssub.s32 2048, 2048
      %29 = vsyncadd [#allocation6], %s28
      %s30 = sshll.u32 [#allocation5], 4
      %s31 = int_to_ptr.vmem [resolvable:$true] %s30
      %36 = dma.hbm_to_vmem [thread:$0]  %s1, 2048, %s31, [#allocation6], 128, 128, 8
    $region9: #{tpu_custom_call.1} parent=1 // pred_fallthru
      _
    // Predicated region
    $region10: #{tpu_custom_call.1} parent=1 // pred_check
      _
    $region11: #{tpu_custom_call.1} parent=1 // pred_check_branch
      %38 = sbr.rel (0) target = $region13
    $region12: #{tpu_custom_call.1} parent=1 // pred_region
      %s40 = ssub.s32 2048, 2048
      %41 = vsyncadd [#allocation6], %s40
      %s42 = sshll.u32 [#allocation7], 4
      %s43 = int_to_ptr.vmem [resolvable:$true] %s42
      %48 = dma.hbm_to_vmem [thread:$0]  %s2, 2048, %s43, [#allocation6], 128, 128, 8
    $region13: #{tpu_custom_call.1} parent=1 // pred_fallthru
      _
    // Predicated region
    $region14: #{tpu_custom_call.1} parent=1 // pred_check
      _
    $region15: #{tpu_custom_call.1} parent=1 // pred_check_branch
      %50 = sbr.rel (0) target = $region17
    $region16: #{tpu_custom_call.1} parent=1 // pred_region
      %s52 = ssub.s32 2048, 2048
      %53 = vsyncadd [#allocation9], %s52
      %s54 = sshll.u32 [#allocation8], 4
      %s55 = int_to_ptr.vmem [resolvable:$true] %s54
      %60 = dma.hbm_to_vmem [thread:$0]  %s3, 2048, %s55, [#allocation9], 128, 128, 8
    $region17: #{tpu_custom_call.1} parent=1 // pred_fallthru
      _
    // Predicated region
    $region18: #{tpu_custom_call.1} parent=1 // pred_check
      _
    $region19: #{tpu_custom_call.1} parent=1 // pred_check_branch
      %62 = sbr.rel (0) target = $region21
    $region20: #{tpu_custom_call.1} parent=1 // pred_region
      %s64 = ssub.s32 2048, 2048
      %65 = vsyncadd [#allocation9], %s64
      %s66 = sshll.u32 [#allocation10], 4
      %s67 = int_to_ptr.vmem [resolvable:$true] %s66
      %72 = dma.hbm_to_vmem [thread:$0]  %s4, 2048, %s67, [#allocation9], 128, 128, 8
    $region21: #{tpu_custom_call.1} parent=1 // pred_fallthru
      _
    // Predicated region
    $region22: #{tpu_custom_call.1} parent=1 // pred_check
      _
    $region23: #{tpu_custom_call.1} parent=1 // pred_check_branch
      %74 = sbr.rel (0) target = $region25
    $region24: #{tpu_custom_call.1} parent=1 // pred_region
      _
    $region25: #{tpu_custom_call.1} parent=1 // pred_fallthru
      _
    // Predicated region
    $region26: #{tpu_custom_call.1} parent=1 // pred_check
      _
    $region27: #{tpu_custom_call.1} parent=1 // pred_check_branch
      %76 = sbr.rel (0) target = $region29
    $region28: #{tpu_custom_call.1} parent=1 // pred_region
      %77 = dma.done [#allocation3], 128
    $region29: #{tpu_custom_call.1} parent=1 // pred_fallthru
      _
    // Predicated region
    $region30: #{tpu_custom_call.1} parent=1 // pred_check
      _
    $region31: #{tpu_custom_call.1} parent=1 // pred_check_branch
      %79 = sbr.rel (0) target = $region33
    $region32: #{tpu_custom_call.1} parent=1 // pred_region
      %80 = dma.done [#allocation6], 2048
    $region33: #{tpu_custom_call.1} parent=1 // pred_fallthru
      _
    // Predicated region
    $region34: #{tpu_custom_call.1} parent=1 // pred_check
      _
    $region35: #{tpu_custom_call.1} parent=1 // pred_check_branch
      %82 = sbr.rel (0) target = $region37
    $region36: #{tpu_custom_call.1} parent=1 // pred_region
      %83 = dma.done [#allocation6], 2048
    $region37: #{tpu_custom_call.1} parent=1 // pred_fallthru
      _
    // Predicated region
    $region38: #{tpu_custom_call.1} parent=1 // pred_check
      _
    $region39: #{tpu_custom_call.1} parent=1 // pred_check_branch
      %85 = sbr.rel (0) target = $region41
    $region40: #{tpu_custom_call.1} parent=1 // pred_region
      %86 = dma.done [#allocation9], 2048
    $region41: #{tpu_custom_call.1} parent=1 // pred_fallthru
      _
    // Predicated region
    $region42: #{tpu_custom_call.1} parent=1 // pred_check
      _
    $region43: #{tpu_custom_call.1} parent=1 // pred_check_branch
      %88 = sbr.rel (0) target = $region45
    $region44: #{tpu_custom_call.1} parent=1 // pred_region
      %89 = dma.done [#allocation9], 2048
    $region45: #{tpu_custom_call.1} parent=1 // pred_fallthru
      _
    %v90 = vld [vmem:[%s5] sm:$0x1]
    %v91 = vld [vmem:[%s5 + $0x1] sm:$0x1]
    %v92 = vld [vmem:[%s5 + $0x2] sm:$0x1]
    %v93 = vld [vmem:[%s5 + $0x3] sm:$0x1]
    %v94 = vld [vmem:[#allocation2] sm:$0xff]
    %v95 = vld [vmem:[#allocation5] sm:$0xff]
    %v96 = vld [vmem:[#allocation5 + $0x8] sm:$0xff]
    %v97 = vld [vmem:[#allocation5 + $0x10] sm:$0xff]
    %v98 = vld [vmem:[#allocation5 + $0x18] sm:$0xff]
    %v99 = vld [vmem:[#allocation5 + $0x20] sm:$0xff]
    %v100 = vld [vmem:[#allocation5 + $0x28] sm:$0xff]
    %v101 = vld [vmem:[#allocation5 + $0x30] sm:$0xff]
    %v102 = vld [vmem:[#allocation5 + $0x38] sm:$0xff]
    %v103 = vld [vmem:[#allocation5 + $0x40] sm:$0xff]
    %v104 = vld [vmem:[#allocation5 + $0x48] sm:$0xff]
    %v105 = vld [vmem:[#allocation5 + $0x50] sm:$0xff]
    %v106 = vld [vmem:[#allocation5 + $0x58] sm:$0xff]
    %v107 = vld [vmem:[#allocation5 + $0x60] sm:$0xff]
    %v108 = vld [vmem:[#allocation5 + $0x68] sm:$0xff]
    %v109 = vld [vmem:[#allocation5 + $0x70] sm:$0xff]
    %v110 = vld [vmem:[#allocation5 + $0x78] sm:$0xff]
    %v111 = vlaneseq
    %v112 = vshrl.u32 %v111, 7
    %v113 = vsub.s32 0, %v112
    %v114 = vrot.slane %v90, %v113
    %115 = vmatprep.subr.mxu0 0.0
    %116 = vmatpush1.msra.mxu0 %v95
    %117 = vmatprep.subr.mxu0 0.0
    %118 = vmatpush1.msra.mxu0 %v96
    %119 = vmatprep.subr.mxu0 0.0
    %120 = vmatpush1.msra.mxu0 %v97
    %121 = vmatprep.subr.mxu0 0.0
    %122 = vmatpush1.msra.mxu0 %v98
    %123 = vmatprep.subr.mxu0 0.0
    %124 = vmatpush1.msra.mxu0 %v99
    %125 = vmatprep.subr.mxu0 0.0
    %126 = vmatpush1.msra.mxu0 %v100
    %127 = vmatprep.subr.mxu0 0.0
    %128 = vmatpush1.msra.mxu0 %v101
    %129 = vmatprep.subr.mxu0 0.0
    %130 = vmatpush1.msra.mxu0 %v102
    %131 = vmatprep.subr.mxu0 0.0
    %132 = vmatpush1.msra.mxu0 %v103
    %133 = vmatprep.subr.mxu0 0.0
    %134 = vmatpush1.msra.mxu0 %v104
    %135 = vmatprep.subr.mxu0 0.0
    %136 = vmatpush1.msra.mxu0 %v105
    %137 = vmatprep.subr.mxu0 0.0
    %138 = vmatpush1.msra.mxu0 %v106
    %139 = vmatprep.subr.mxu0 0.0
    %140 = vmatpush1.msra.mxu0 %v107
    %141 = vmatprep.subr.mxu0 0.0
    %142 = vmatpush1.msra.mxu0 %v108
    %143 = vmatprep.subr.mxu0 0.0
    %144 = vmatpush1.msra.mxu0 %v109
    %145 = vmatprep.subr.mxu0 0.0
    %146 = vmatpush1.msra.mxu0 %v110
    %147 = vmatprep.subr.mxu0 0.0
    %148 = vmatpush1.msra.mxu0 0.0
    %149 = vmatprep.subr.mxu0 0.0
    %150 = vmatpush1.msra.mxu0 0.0
    %151 = vmatprep.subr.mxu0 0.0
    %152 = vmatpush1.msra.mxu0 0.0
    %153 = vmatprep.subr.mxu0 0.0
    %154 = vmatpush1.msra.mxu0 0.0
    %155 = vmatprep.subr.mxu0 0.0
    %156 = vmatpush1.msra.mxu0 0.0
    %157 = vmatprep.subr.mxu0 0.0
    %158 = vmatpush1.msra.mxu0 0.0
    %159 = vmatprep.subr.mxu0 0.0
    %160 = vmatpush1.msra.mxu0 0.0
    %161 = vmatprep.subr.mxu0 0.0
    %162 = vmatpush1.msra.mxu0 0.0
    %163 = vmatprep.subr.mxu0 0.0
    %164 = vmatpush1.msra.mxu0 0.0
    %165 = vmatprep.subr.mxu0 0.0
    %166 = vmatpush1.msra.mxu0 0.0
    %167 = vmatprep.subr.mxu0 0.0
    %168 = vmatpush1.msra.mxu0 0.0
    %169 = vmatprep.subr.mxu0 0.0
    %170 = vmatpush1.msra.mxu0 0.0
    %171 = vmatprep.subr.mxu0 0.0
    %172 = vmatpush1.msra.mxu0 0.0
    %173 = vmatprep.subr.mxu0 0.0
    %174 = vmatpush1.msra.mxu0 0.0
    %175 = vmatprep.subr.mxu0 0.0
    %176 = vmatpush1.msra.mxu0 0.0
    %177 = vmatprep.subr.mxu0 0.0
    %178 = vmatpush1.msra.mxu0 0.0
    %179 = vmatprep.mubr.f32.mxu0 0.0
    %180 = vmatmul.mubr.f32.gmra.mrb[0].mxu0 %v94
    %v181 = vpop.f32.mrb[0].mxu0
    %v182 = vadd.f32 %v114, %v181
    %v183 = vpop.f32.mrb[0].mxu0
    %184 = vdwg.mxu0
    %v185 = vmax.f32 %v182, 0.0
    %v186 = vld [vmem:[#allocation7] sm:$0xff]
    %v187 = vld [vmem:[#allocation7 + $0x8] sm:$0xff]
    %v188 = vld [vmem:[#allocation7 + $0x10] sm:$0xff]
    %v189 = vld [vmem:[#allocation7 + $0x18] sm:$0xff]
    %v190 = vld [vmem:[#allocation7 + $0x20] sm:$0xff]
    %v191 = vld [vmem:[#allocation7 + $0x28] sm:$0xff]
    %v192 = vld [vmem:[#allocation7 + $0x30] sm:$0xff]
    %v193 = vld [vmem:[#allocation7 + $0x38] sm:$0xff]
    %v194 = vld [vmem:[#allocation7 + $0x40] sm:$0xff]
    %v195 = vld [vmem:[#allocation7 + $0x48] sm:$0xff]
    %v196 = vld [vmem:[#allocation7 + $0x50] sm:$0xff]
    %v197 = vld [vmem:[#allocation7 + $0x58] sm:$0xff]
    %v198 = vld [vmem:[#allocation7 + $0x60] sm:$0xff]
    %v199 = vld [vmem:[#allocation7 + $0x68] sm:$0xff]
    %v200 = vld [vmem:[#allocation7 + $0x70] sm:$0xff]
    %v201 = vld [vmem:[#allocation7 + $0x78] sm:$0xff]
    %v202 = vlaneseq
    %v203 = vshrl.u32 %v202, 7
    %v204 = vsub.s32 0, %v203
    %v205 = vrot.slane %v91, %v204
    %206 = vmatprep.subr.mxu0 0.0
    %207 = vmatpush1.msra.mxu0 %v186
    %208 = vmatprep.subr.mxu0 0.0
    %209 = vmatpush1.msra.mxu0 %v187
    %210 = vmatprep.subr.mxu0 0.0
    %211 = vmatpush1.msra.mxu0 %v188
    %212 = vmatprep.subr.mxu0 0.0
    %213 = vmatpush1.msra.mxu0 %v189
    %214 = vmatprep.subr.mxu0 0.0
    %215 = vmatpush1.msra.mxu0 %v190
    %216 = vmatprep.subr.mxu0 0.0
    %217 = vmatpush1.msra.mxu0 %v191
    %218 = vmatprep.subr.mxu0 0.0
    %219 = vmatpush1.msra.mxu0 %v192
    %220 = vmatprep.subr.mxu0 0.0
    %221 = vmatpush1.msra.mxu0 %v193
    %222 = vmatprep.subr.mxu0 0.0
    %223 = vmatpush1.msra.mxu0 %v194
    %224 = vmatprep.subr.mxu0 0.0
    %225 = vmatpush1.msra.mxu0 %v195
    %226 = vmatprep.subr.mxu0 0.0
    %227 = vmatpush1.msra.mxu0 %v196
    %228 = vmatprep.subr.mxu0 0.0
    %229 = vmatpush1.msra.mxu0 %v197
    %230 = vmatprep.subr.mxu0 0.0
    %231 = vmatpush1.msra.mxu0 %v198
    %232 = vmatprep.subr.mxu0 0.0
    %233 = vmatpush1.msra.mxu0 %v199
    %234 = vmatprep.subr.mxu0 0.0
    %235 = vmatpush1.msra.mxu0 %v200
    %236 = vmatprep.subr.mxu0 0.0
    %237 = vmatpush1.msra.mxu0 %v201
    %238 = vmatprep.subr.mxu0 0.0
    %239 = vmatpush1.msra.mxu0 0.0
    %240 = vmatprep.subr.mxu0 0.0
    %241 = vmatpush1.msra.mxu0 0.0
    %242 = vmatprep.subr.mxu0 0.0
    %243 = vmatpush1.msra.mxu0 0.0
    %244 = vmatprep.subr.mxu0 0.0
    %245 = vmatpush1.msra.mxu0 0.0
    %246 = vmatprep.subr.mxu0 0.0
    %247 = vmatpush1.msra.mxu0 0.0
    %248 = vmatprep.subr.mxu0 0.0
    %249 = vmatpush1.msra.mxu0 0.0
    %250 = vmatprep.subr.mxu0 0.0
    %251 = vmatpush1.msra.mxu0 0.0
    %252 = vmatprep.subr.mxu0 0.0
    %253 = vmatpush1.msra.mxu0 0.0
    %254 = vmatprep.subr.mxu0 0.0
    %255 = vmatpush1.msra.mxu0 0.0
    %256 = vmatprep.subr.mxu0 0.0
    %257 = vmatpush1.msra.mxu0 0.0
    %258 = vmatprep.subr.mxu0 0.0
    %259 = vmatpush1.msra.mxu0 0.0
    %260 = vmatprep.subr.mxu0 0.0
    %261 = vmatpush1.msra.mxu0 0.0
    %262 = vmatprep.subr.mxu0 0.0
    %263 = vmatpush1.msra.mxu0 0.0
    %264 = vmatprep.subr.mxu0 0.0
    %265 = vmatpush1.msra.mxu0 0.0
    %266 = vmatprep.subr.mxu0 0.0
    %267 = vmatpush1.msra.mxu0 0.0
    %268 = vmatprep.subr.mxu0 0.0
    %269 = vmatpush1.msra.mxu0 0.0
    %270 = vmatprep.mubr.f32.mxu0 0.0
    %271 = vmatmul.mubr.f32.gmra.mrb[0].mxu0 %v185
    %v272 = vpop.f32.mrb[0].mxu0
    %v273 = vadd.f32 %v205, %v272
    %v274 = vpop.f32.mrb[0].mxu0
    %275 = vdwg.mxu0
    %v276 = vmax.f32 %v273, 0.0
    %v277 = vld [vmem:[#allocation8] sm:$0xff]
    %v278 = vld [vmem:[#allocation8 + $0x8] sm:$0xff]
    %v279 = vld [vmem:[#allocation8 + $0x10] sm:$0xff]
    %v280 = vld [vmem:[#allocation8 + $0x18] sm:$0xff]
    %v281 = vld [vmem:[#allocation8 + $0x20] sm:$0xff]
    %v282 = vld [vmem:[#allocation8 + $0x28] sm:$0xff]
    %v283 = vld [vmem:[#allocation8 + $0x30] sm:$0xff]
    %v284 = vld [vmem:[#allocation8 + $0x38] sm:$0xff]
    %v285 = vld [vmem:[#allocation8 + $0x40] sm:$0xff]
    %v286 = vld [vmem:[#allocation8 + $0x48] sm:$0xff]
    %v287 = vld [vmem:[#allocation8 + $0x50] sm:$0xff]
    %v288 = vld [vmem:[#allocation8 + $0x58] sm:$0xff]
    %v289 = vld [vmem:[#allocation8 + $0x60] sm:$0xff]
    %v290 = vld [vmem:[#allocation8 + $0x68] sm:$0xff]
    %v291 = vld [vmem:[#allocation8 + $0x70] sm:$0xff]
    %v292 = vld [vmem:[#allocation8 + $0x78] sm:$0xff]
    %v293 = vlaneseq
    %v294 = vshrl.u32 %v293, 7
    %v295 = vsub.s32 0, %v294
    %v296 = vrot.slane %v92, %v295
    %297 = vmatprep.subr.mxu0 0.0
    %298 = vmatpush1.msra.mxu0 %v277
    %299 = vmatprep.subr.mxu0 0.0
    %300 = vmatpush1.msra.mxu0 %v278
    %301 = vmatprep.subr.mxu0 0.0
    %302 = vmatpush1.msra.mxu0 %v279
    %303 = vmatprep.subr.mxu0 0.0
    %304 = vmatpush1.msra.mxu0 %v280
    %305 = vmatprep.subr.mxu0 0.0
    %306 = vmatpush1.msra.mxu0 %v281
    %307 = vmatprep.subr.mxu0 0.0
    %308 = vmatpush1.msra.mxu0 %v282
    %309 = vmatprep.subr.mxu0 0.0
    %310 = vmatpush1.msra.mxu0 %v283
    %311 = vmatprep.subr.mxu0 0.0
    %312 = vmatpush1.msra.mxu0 %v284
    %313 = vmatprep.subr.mxu0 0.0
    %314 = vmatpush1.msra.mxu0 %v285
    %315 = vmatprep.subr.mxu0 0.0
    %316 = vmatpush1.msra.mxu0 %v286
    %317 = vmatprep.subr.mxu0 0.0
    %318 = vmatpush1.msra.mxu0 %v287
    %319 = vmatprep.subr.mxu0 0.0
    %320 = vmatpush1.msra.mxu0 %v288
    %321 = vmatprep.subr.mxu0 0.0
    %322 = vmatpush1.msra.mxu0 %v289
    %323 = vmatprep.subr.mxu0 0.0
    %324 = vmatpush1.msra.mxu0 %v290
    %325 = vmatprep.subr.mxu0 0.0
    %326 = vmatpush1.msra.mxu0 %v291
    %327 = vmatprep.subr.mxu0 0.0
    %328 = vmatpush1.msra.mxu0 %v292
    %329 = vmatprep.subr.mxu0 0.0
    %330 = vmatpush1.msra.mxu0 0.0
    %331 = vmatprep.subr.mxu0 0.0
    %332 = vmatpush1.msra.mxu0 0.0
    %333 = vmatprep.subr.mxu0 0.0
    %334 = vmatpush1.msra.mxu0 0.0
    %335 = vmatprep.subr.mxu0 0.0
    %336 = vmatpush1.msra.mxu0 0.0
    %337 = vmatprep.subr.mxu0 0.0
    %338 = vmatpush1.msra.mxu0 0.0
    %339 = vmatprep.subr.mxu0 0.0
    %340 = vmatpush1.msra.mxu0 0.0
    %341 = vmatprep.subr.mxu0 0.0
    %342 = vmatpush1.msra.mxu0 0.0
    %343 = vmatprep.subr.mxu0 0.0
    %344 = vmatpush1.msra.mxu0 0.0
    %345 = vmatprep.subr.mxu0 0.0
    %346 = vmatpush1.msra.mxu0 0.0
    %347 = vmatprep.subr.mxu0 0.0
    %348 = vmatpush1.msra.mxu0 0.0
    %349 = vmatprep.subr.mxu0 0.0
    %350 = vmatpush1.msra.mxu0 0.0
    %351 = vmatprep.subr.mxu0 0.0
    %352 = vmatpush1.msra.mxu0 0.0
    %353 = vmatprep.subr.mxu0 0.0
    %354 = vmatpush1.msra.mxu0 0.0
    %355 = vmatprep.subr.mxu0 0.0
    %356 = vmatpush1.msra.mxu0 0.0
    %357 = vmatprep.subr.mxu0 0.0
    %358 = vmatpush1.msra.mxu0 0.0
    %359 = vmatprep.subr.mxu0 0.0
    %360 = vmatpush1.msra.mxu0 0.0
    %361 = vmatprep.mubr.f32.mxu0 0.0
    %362 = vmatmul.mubr.f32.gmra.mrb[0].mxu0 %v276
    %v363 = vpop.f32.mrb[0].mxu0
    %v364 = vadd.f32 %v296, %v363
    %v365 = vpop.f32.mrb[0].mxu0
    %366 = vdwg.mxu0
    %v367 = vmax.f32 %v364, 0.0
    %v368 = vld [vmem:[#allocation10] sm:$0xff]
    %v369 = vld [vmem:[#allocation10 + $0x8] sm:$0xff]
    %v370 = vld [vmem:[#allocation10 + $0x10] sm:$0xff]
    %v371 = vld [vmem:[#allocation10 + $0x18] sm:$0xff]
    %v372 = vld [vmem:[#allocation10 + $0x20] sm:$0xff]
    %v373 = vld [vmem:[#allocation10 + $0x28] sm:$0xff]
    %v374 = vld [vmem:[#allocation10 + $0x30] sm:$0xff]
    %v375 = vld [vmem:[#allocation10 + $0x38] sm:$0xff]
    %v376 = vld [vmem:[#allocation10 + $0x40] sm:$0xff]
    %v377 = vld [vmem:[#allocation10 + $0x48] sm:$0xff]
    %v378 = vld [vmem:[#allocation10 + $0x50] sm:$0xff]
    %v379 = vld [vmem:[#allocation10 + $0x58] sm:$0xff]
    %v380 = vld [vmem:[#allocation10 + $0x60] sm:$0xff]
    %v381 = vld [vmem:[#allocation10 + $0x68] sm:$0xff]
    %v382 = vld [vmem:[#allocation10 + $0x70] sm:$0xff]
    %v383 = vld [vmem:[#allocation10 + $0x78] sm:$0xff]
    %v384 = vlaneseq
    %v385 = vshrl.u32 %v384, 7
    %v386 = vsub.s32 0, %v385
    %v387 = vrot.slane %v93, %v386
    %388 = vmatprep.subr.mxu0 0.0
    %389 = vmatpush1.msra.mxu0 %v368
    %390 = vmatprep.subr.mxu0 0.0
    %391 = vmatpush1.msra.mxu0 %v369
    %392 = vmatprep.subr.mxu0 0.0
    %393 = vmatpush1.msra.mxu0 %v370
    %394 = vmatprep.subr.mxu0 0.0
    %395 = vmatpush1.msra.mxu0 %v371
    %396 = vmatprep.subr.mxu0 0.0
    %397 = vmatpush1.msra.mxu0 %v372
    %398 = vmatprep.subr.mxu0 0.0
    %399 = vmatpush1.msra.mxu0 %v373
    %400 = vmatprep.subr.mxu0 0.0
    %401 = vmatpush1.msra.mxu0 %v374
    %402 = vmatprep.subr.mxu0 0.0
    %403 = vmatpush1.msra.mxu0 %v375
    %404 = vmatprep.subr.mxu0 0.0
    %405 = vmatpush1.msra.mxu0 %v376
    %406 = vmatprep.subr.mxu0 0.0
    %407 = vmatpush1.msra.mxu0 %v377
    %408 = vmatprep.subr.mxu0 0.0
    %409 = vmatpush1.msra.mxu0 %v378
    %410 = vmatprep.subr.mxu0 0.0
    %411 = vmatpush1.msra.mxu0 %v379
    %412 = vmatprep.subr.mxu0 0.0
    %413 = vmatpush1.msra.mxu0 %v380
    %414 = vmatprep.subr.mxu0 0.0
    %415 = vmatpush1.msra.mxu0 %v381
    %416 = vmatprep.subr.mxu0 0.0
    %417 = vmatpush1.msra.mxu0 %v382
    %418 = vmatprep.subr.mxu0 0.0
    %419 = vmatpush1.msra.mxu0 %v383
    %420 = vmatprep.subr.mxu0 0.0
    %421 = vmatpush1.msra.mxu0 0.0
    %422 = vmatprep.subr.mxu0 0.0
    %423 = vmatpush1.msra.mxu0 0.0
    %424 = vmatprep.subr.mxu0 0.0
    %425 = vmatpush1.msra.mxu0 0.0
    %426 = vmatprep.subr.mxu0 0.0
    %427 = vmatpush1.msra.mxu0 0.0
    %428 = vmatprep.subr.mxu0 0.0
    %429 = vmatpush1.msra.mxu0 0.0
    %430 = vmatprep.subr.mxu0 0.0
    %431 = vmatpush1.msra.mxu0 0.0
    %432 = vmatprep.subr.mxu0 0.0
    %433 = vmatpush1.msra.mxu0 0.0
    %434 = vmatprep.subr.mxu0 0.0
    %435 = vmatpush1.msra.mxu0 0.0
    %436 = vmatprep.subr.mxu0 0.0
    %437 = vmatpush1.msra.mxu0 0.0
    %438 = vmatprep.subr.mxu0 0.0
    %439 = vmatpush1.msra.mxu0 0.0
    %440 = vmatprep.subr.mxu0 0.0
    %441 = vmatpush1.msra.mxu0 0.0
    %442 = vmatprep.subr.mxu0 0.0
    %443 = vmatpush1.msra.mxu0 0.0
    %444 = vmatprep.subr.mxu0 0.0
    %445 = vmatpush1.msra.mxu0 0.0
    %446 = vmatprep.subr.mxu0 0.0
    %447 = vmatpush1.msra.mxu0 0.0
    %448 = vmatprep.subr.mxu0 0.0
    %449 = vmatpush1.msra.mxu0 0.0
    %450 = vmatprep.subr.mxu0 0.0
    %451 = vmatpush1.msra.mxu0 0.0
    %452 = vmatprep.mubr.f32.mxu0 0.0
    %453 = vmatmul.mubr.f32.gmra.mrb[0].mxu0 %v367
    %v454 = vpop.f32.mrb[0].mxu0
    %v455 = vadd.f32 %v387, %v454
    %v456 = vpop.f32.mrb[0].mxu0
    %457 = vdwg.mxu0
    %458 = vst [vmem:[#allocation11] sm:$0xff] %v455
    // Predicated region
    $region46: #{tpu_custom_call.1} parent=1 // pred_check
      _
    $region47: #{tpu_custom_call.1} parent=1 // pred_check_branch
      %460 = sbr.rel (0) target = $region49
    $region48: #{tpu_custom_call.1} parent=1 // pred_region
      %s462 = ssub.s32 128, 128
      %463 = vsyncadd [#allocation4], %s462
      %s465 = sshll.u32 [#allocation11], 4
      %s466 = int_to_ptr.vmem [resolvable:$true] %s465
      %468 = dma.vmem_to_hbm [thread:$0]  %s466, 128, %s6, [#allocation4]
    $region49: #{tpu_custom_call.1} parent=1 // pred_fallthru
      _
    // Predicated region
    $region50: #{tpu_custom_call.1} parent=1 // pred_check
      _
    $region51: #{tpu_custom_call.1} parent=1 // pred_check_branch
      %470 = sbr.rel (0) target = $region53
    $region52: #{tpu_custom_call.1} parent=1 // pred_region
      %471 = dma.done [#allocation4], 128
    $region53: #{tpu_custom_call.1} parent=1 // pred_fallthru
      _
    %472 = vsyncpa [#allocation3], 1
    %473 = vsyncpa [#allocation6], 1
    %474 = vsyncpa [#allocation9], 1
    %475 = vsyncpa [#allocation4], 1

</llo_original>
